<compile_context>
chip_gen: v5e
topology: v5e:2x2
jax: 0.10.0
libtpu: 0.0.40
codegen_flags: <defaults>
</compile_context>

<pallas_src>
import numpy as np
import jax
import jax.numpy as jnp
from jax import lax
from jax.experimental import pallas as pl
from jax.experimental.pallas import tpu as pltpu

# ---- model dims (small, consistent with a tiny CLIP text encoder) -----------
D = 32            # transformer width
T = 8             # text context length
H = 4             # attention heads
HD = D // H       # head dim
FF = 4 * D        # MLP hidden
PROJ = 32         # projection dim
VOCAB = 64

# rows of the packed small-parameter slab (each row uses lanes [0:D] unless noted)
ROW_LN1_G, ROW_LN1_B, ROW_BO, ROW_LN2_G, ROW_LN2_B, ROW_B2, ROW_LNF_G, ROW_LNF_B = range(8)
ROW_B1 = 8        # lanes [0:FF]
ROW_BQKV = 9      # lanes [0:3*D]
N_ROWS = 10


def _layernorm(h, g, b, eps=1e-5):
    mu = jnp.mean(h, axis=-1, keepdims=True)
    var = jnp.mean(jnp.square(h - mu), axis=-1, keepdims=True)
    return (h - mu) * lax.rsqrt(var + eps) * g + b


# ------------------------------- Pallas kernel -------------------------------
def clip_text_kernel(eot_ref,                      # scalar-prefetch: (1,) int32 in SMEM
                     x_ref,                        # (T, D) token+pos embeddings
                     psmall_ref,                   # (10, FF) packed biases / LN params
                     wqkv_ref,                     # (D, 3D) fused qkv weight
                     w1_ref,                       # (D, FF)
                     w2_ref,                       # (FF, D)
                     wop_ref,                      # (D, D+PROJ): [wo | wproj]
                     xf_out_ref, xf_proj_ref):
    x = x_ref[...]                                 # (T, D) fp32
    ps = psmall_ref[...]                           # (10, FF)

    ln1_g = ps[ROW_LN1_G:ROW_LN1_G + 1, :D]
    ln1_b = ps[ROW_LN1_B:ROW_LN1_B + 1, :D]
    bo    = ps[ROW_BO:ROW_BO + 1, :D]
    ln2_g = ps[ROW_LN2_G:ROW_LN2_G + 1, :D]
    ln2_b = ps[ROW_LN2_B:ROW_LN2_B + 1, :D]
    b2    = ps[ROW_B2:ROW_B2 + 1, :D]
    lnf_g = ps[ROW_LNF_G:ROW_LNF_G + 1, :D]
    lnf_b = ps[ROW_LNF_B:ROW_LNF_B + 1, :D]
    b1    = ps[ROW_B1:ROW_B1 + 1, :FF]
    bqkv  = ps[ROW_BQKV:ROW_BQKV + 1, :3 * D]

    # --- pre-LN causal multi-head self-attention (fused QKV + fused out-proj) -
    h = _layernorm(x, ln1_g, ln1_b)
    qkv = jnp.dot(h, wqkv_ref[...], preferred_element_type=jnp.float32) + bqkv  # (T, 3D)
    q = qkv[:, 0:D]
    k = qkv[:, D:2 * D]
    v = qkv[:, 2 * D:3 * D]

    row = lax.broadcasted_iota(jnp.int32, (T, T), 0)
    col = lax.broadcasted_iota(jnp.int32, (T, T), 1)
    causal = row >= col
    scale = jnp.float32(1.0 / np.sqrt(HD))

    heads = []
    for hh in range(H):                            # tiny (8,8) score / pv dots per head
        qh = q[:, hh * HD:(hh + 1) * HD]
        kh = k[:, hh * HD:(hh + 1) * HD]
        vh = v[:, hh * HD:(hh + 1) * HD]
        s = jnp.dot(qh, kh.T, preferred_element_type=jnp.float32) * scale
        s = jnp.where(causal, s, jnp.float32(-1e9))
        s = s - jnp.max(s, axis=-1, keepdims=True)
        p = jnp.exp(s)
        p = p * pl.reciprocal(jnp.sum(p, axis=-1, keepdims=True), approx=True)
        heads.append(jnp.dot(p, vh, preferred_element_type=jnp.float32))        # (T, HD)
    attn = jnp.concatenate(heads, axis=-1)                                       # (T, D)

    wop = wop_ref[...]
    wo = wop[:, :D]
    wproj = wop[:, D:]
    x = x + jnp.dot(attn, wo, preferred_element_type=jnp.float32) + bo

    # --- MLP ------------------------------------------------------------------
    h = _layernorm(x, ln2_g, ln2_b)
    ff = jnp.dot(h, w1_ref[...], preferred_element_type=jnp.float32) + b1
    ff = jax.nn.gelu(ff, approximate=True)
    x = x + jnp.dot(ff, w2_ref[...], preferred_element_type=jnp.float32) + b2

    # --- final LN, per-token output + EOT pooling + projection (in-register) --
    xf = _layernorm(x, lnf_g, lnf_b)
    xf_out_ref[...] = xf

    eot = eot_ref[0]
    onehot = (lax.broadcasted_iota(jnp.int32, (1, T), 1) == eot).astype(jnp.float32)
    pooled = jnp.dot(onehot, xf, preferred_element_type=jnp.float32)            # (1, D)
    xf_proj_ref[...] = jnp.dot(pooled, wproj, preferred_element_type=jnp.float32)


def clip_text_encode(packed, x_emb, eot_idx):
    """x_emb: (T, D) fp32, eot_idx: (1,) int32 -> (xf_out (T, D), xf_proj (1, PROJ))."""
    nz = lambda i, eot: (0, 0)
    in_specs = [
        pl.BlockSpec((T, D), nz),                    # x
        pl.BlockSpec((N_ROWS, FF), nz),              # packed small params
        pl.BlockSpec((D, 3 * D), nz),                # wqkv
        pl.BlockSpec((D, FF), nz),                   # w1
        pl.BlockSpec((FF, D), nz),                   # w2
        pl.BlockSpec((D, D + PROJ), nz),             # [wo | wproj]
    ]
    out_specs = [
        pl.BlockSpec((T, D), nz),
        pl.BlockSpec((1, PROJ), nz),
    ]
    out_shape = (jax.ShapeDtypeStruct((T, D), jnp.float32),
                 jax.ShapeDtypeStruct((1, PROJ), jnp.float32))
    xf_out, xf_proj = pl.pallas_call(
        clip_text_kernel,
        out_shape=out_shape,
        grid_spec=pltpu.PrefetchScalarGridSpec(
            num_scalar_prefetch=1,
            grid=(1,),
            in_specs=in_specs,
            out_specs=out_specs),
        compiler_params=pltpu.CompilerParams(
            dimension_semantics=("arbitrary",)),
    )(eot_idx, x_emb, packed["psmall"], packed["wqkv"], packed["w1"],
      packed["w2"], packed["wop"])
    return xf_out, xf_proj


# ------------------------------ pure-JAX reference ---------------------------
def reference_encode(params, x_emb, eot_idx):
    """Unfused, per-head reference on the replicated (B, T, D) embeddings."""
    outs, projs = [], []
    for bi in range(x_emb.shape[0]):
        x = x_emb[bi]
        h = _layernorm(x, params["ln1_g"], params["ln1_b"])
        row = lax.broadcasted_iota(jnp.int32, (T, T), 0)
        col = lax.broadcasted_iota(jnp.int32, (T, T), 1)
        causal = row >= col
        attn = jnp.zeros((T, D), jnp.float32)
        for hh in range(H):
            q = h @ params["wq"][hh] + params["bq"][hh]
            k = h @ params["wk"][hh] + params["bk"][hh]
            v = h @ params["wv"][hh] + params["bv"][hh]
            s = (q @ k.T) * (1.0 / np.sqrt(HD))
            s = jnp.where(causal, s, -1e9)
            p = jax.nn.softmax(s, axis=-1)
            attn = attn + (p @ v) @ params["wo"][hh]
        x = x + attn + params["bo"]
        h = _layernorm(x, params["ln2_g"], params["ln2_b"])
        ff = jax.nn.gelu(h @ params["w1"] + params["b1"], approximate=True)
        x = x + ff @ params["w2"] + params["b2"]
        xf = _layernorm(x, params["lnf_g"], params["lnf_b"])
        outs.append(xf)
        projs.append(xf[eot_idx[bi]] @ params["wproj"])
    return jnp.stack(outs), jnp.stack(projs)


# ------------------------------- glue / params -------------------------------
def init_params(key):
    ks = iter(jax.random.split(key, 24))
    n = lambda shape, s: jax.random.normal(next(ks), shape, jnp.float32) * s
    p = {}
    p["tok_emb"] = n((VOCAB, D), 0.02)
    p["pos_emb"] = n((T, D), 0.01)
    p["ln1_g"] = jnp.ones((1, D), jnp.float32)
    p["ln1_b"] = jnp.zeros((1, D), jnp.float32)
    p["wq"] = n((H, D, HD), D ** -0.5)
    p["bq"] = jnp.zeros((H, 1, HD), jnp.float32)
    p["wk"] = n((H, D, HD), D ** -0.5)
    p["bk"] = jnp.zeros((H, 1, HD), jnp.float32)
    p["wv"] = n((H, D, HD), D ** -0.5)
    p["bv"] = jnp.zeros((H, 1, HD), jnp.float32)
    p["wo"] = n((H, HD, D), D ** -0.5)
    p["bo"] = jnp.zeros((1, D), jnp.float32)
    p["ln2_g"] = jnp.ones((1, D), jnp.float32)
    p["ln2_b"] = jnp.zeros((1, D), jnp.float32)
    p["w1"] = n((D, FF), D ** -0.5)
    p["b1"] = jnp.zeros((1, FF), jnp.float32)
    p["w2"] = n((FF, D), FF ** -0.5)
    p["b2"] = jnp.zeros((1, D), jnp.float32)
    p["lnf_g"] = jnp.ones((1, D), jnp.float32)
    p["lnf_b"] = jnp.zeros((1, D), jnp.float32)
    p["wproj"] = n((D, PROJ), D ** -0.5)
    return p


def pack_params(p):
    """Fuse per-head weights and pack tiny vectors into one slab for the kernel."""
    # fused QKV weight: (D, 3D), column block hh*HD:(hh+1)*HD == wq[hh]
    wq = jnp.transpose(p["wq"], (1, 0, 2)).reshape(D, D)
    wk = jnp.transpose(p["wk"], (1, 0, 2)).reshape(D, D)
    wv = jnp.transpose(p["wv"], (1, 0, 2)).reshape(D, D)
    wqkv = jnp.concatenate([wq, wk, wv], axis=1)                    # (D, 3D)
    bqkv = jnp.concatenate([p["bq"].reshape(-1), p["bk"].reshape(-1),
                            p["bv"].reshape(-1)])                    # (3D,)
    # fused output projection (heads stacked along rows) + final text projection
    wo = p["wo"].reshape(D, D)
    wop = jnp.concatenate([wo, p["wproj"]], axis=1)                  # (D, D+PROJ)

    psmall = jnp.zeros((N_ROWS, FF), jnp.float32)
    rows_D = [p["ln1_g"], p["ln1_b"], p["bo"], p["ln2_g"], p["ln2_b"],
              p["b2"], p["lnf_g"], p["lnf_b"]]
    for i, r in enumerate(rows_D):
        psmall = psmall.at[i, :D].set(r.reshape(D))
    psmall = psmall.at[ROW_B1, :FF].set(p["b1"].reshape(FF))
    psmall = psmall.at[ROW_BQKV, :3 * D].set(bqkv)

    return {"psmall": psmall, "wqkv": wqkv, "w1": p["w1"], "w2": p["w2"],
            "wop": wop}


def tokenize(text, seq_len=T, vocab=VOCAB):
    codes = [(ord(c) % (vocab - 2)) + 1 for c in text][: seq_len - 1]
    eot = len(codes)
    ids = codes + [vocab - 1] + [0] * (seq_len - 1 - len(codes))
    return np.array(ids, dtype=np.int32), eot


class MotionDiffCLIPWrapper:
    """JAX/Pallas port of the torch MotionDiffCLIPWrapper forward pass."""

    def __init__(self, params):
        self.params = params
        self.packed = pack_params(params)

    def __call__(self, text, motion_data):
        B, _ = motion_data["motion"].shape[:2]       # same as the torch module
        ids, eot = tokenize(text)                    # text replicated B times
        x = (self.params["tok_emb"][jnp.asarray(ids)] +
             self.params["pos_emb"]).astype(jnp.float32)           # (T, D)
        # the text (and hence the conditioning) is identical for every batch
        # element -> encode once in the kernel, broadcast outputs to B.
        eot_one = jnp.array([eot], dtype=jnp.int32)
        xf_out1, xf_proj1 = clip_text_encode(self.packed, x, eot_one)
        xf_out = jnp.broadcast_to(xf_out1[None, :, :], (B, T, D))
        xf_proj = jnp.broadcast_to(xf_proj1, (B, PROJ))
        # replicated embeddings / eot indices returned only for reference checking
        x_emb = jnp.broadcast_to(x[None, :, :], (B, T, D))
        eot_idx = jnp.full((B,), eot, dtype=jnp.int32)
        return {"xf_proj": xf_proj, "xf_out": xf_out}, (x_emb, eot_idx)


if __name__ == "__main__":
    key = jax.random.PRNGKey(0)
    k_param, k_motion = jax.random.split(key)
    params = init_params(k_param)

    B = 2
    motion_data = {"motion": jax.random.normal(k_motion, (B, T, 6), jnp.float32)}
    text = "a person walks"

    model = MotionDiffCLIPWrapper(params)
    out, (x_emb, eot_idx) = model(text, motion_data)
    jax.block_until_ready(out)

    # correctness check against an unfused pure-JAX reference
    ref_out, ref_proj = reference_encode(params, x_emb, eot_idx)
    np.testing.assert_allclose(np.asarray(out["xf_out"]), np.asarray(ref_out),
                               rtol=5e-2, atol=5e-2)
    np.testing.assert_allclose(np.asarray(out["xf_proj"]), np.asarray(ref_proj),
                               rtol=5e-2, atol=5e-2)

    print("KERNEL_OK")
</pallas_src>

<mosaic_0001>
module attributes {stable_mosaic.version = 11 : i64} {
  func.func @clip_text_kernel(%arg0: i32, %arg1: memref<1xi32, #tpu.memory_space<smem>>, %arg2: memref<8x32xf32, #tpu.memory_space<vmem>>, %arg3: memref<10x128xf32, #tpu.memory_space<vmem>>, %arg4: memref<32x96xf32, #tpu.memory_space<vmem>>, %arg5: memref<32x128xf32, #tpu.memory_space<vmem>>, %arg6: memref<128x32xf32, #tpu.memory_space<vmem>>, %arg7: memref<32x64xf32, #tpu.memory_space<vmem>>, %arg8: memref<8x32xf32, #tpu.memory_space<vmem>>, %arg9: memref<1x32xf32, #tpu.memory_space<vmem>>) attributes {dimension_semantics = [#tpu.dimension_semantics<arbitrary>], iteration_bounds = array<i64: 1>, scalar_prefetch = 1 : i64, scratch_operands = 0 : i64, tpu.core_type = #tpu.core_type<tc>, window_params = [{pipeline_mode = #tpu.pipeline_mode<synchronous>, transform_indices = @transform_0, window_bounds = array<i64: 8, 32>}, {pipeline_mode = #tpu.pipeline_mode<synchronous>, transform_indices = @transform_1, window_bounds = array<i64: 10, 128>}, {pipeline_mode = #tpu.pipeline_mode<synchronous>, transform_indices = @transform_2, window_bounds = array<i64: 32, 96>}, {pipeline_mode = #tpu.pipeline_mode<synchronous>, transform_indices = @transform_3, window_bounds = array<i64: 32, 128>}, {pipeline_mode = #tpu.pipeline_mode<synchronous>, transform_indices = @transform_4, window_bounds = array<i64: 128, 32>}, {pipeline_mode = #tpu.pipeline_mode<synchronous>, transform_indices = @transform_5, window_bounds = array<i64: 32, 64>}, {pipeline_mode = #tpu.pipeline_mode<synchronous>, transform_indices = @transform_6, window_bounds = array<i64: 8, 32>}, {pipeline_mode = #tpu.pipeline_mode<synchronous>, transform_indices = @transform_7, window_bounds = array<i64: 1, 32>}]} {
    %c0 = arith.constant 0 : index
    %c0_0 = arith.constant 0 : index
    %0 = vector.load %arg2[%c0, %c0_0] : memref<8x32xf32, #tpu.memory_space<vmem>>, vector<8x32xf32>
    %c0_1 = arith.constant 0 : index
    %c0_2 = arith.constant 0 : index
    %1 = vector.load %arg3[%c0_1, %c0_2] : memref<10x128xf32, #tpu.memory_space<vmem>>, vector<10x128xf32>
    %2 = vector.extract_strided_slice %1 {offsets = [0, 0], sizes = [1, 32], strides = [1, 1]} : vector<10x128xf32> to vector<1x32xf32>
    %3 = vector.extract_strided_slice %1 {offsets = [1, 0], sizes = [1, 32], strides = [1, 1]} : vector<10x128xf32> to vector<1x32xf32>
    %4 = vector.extract_strided_slice %1 {offsets = [2, 0], sizes = [1, 32], strides = [1, 1]} : vector<10x128xf32> to vector<1x32xf32>
    %5 = vector.extract_strided_slice %1 {offsets = [3, 0], sizes = [1, 32], strides = [1, 1]} : vector<10x128xf32> to vector<1x32xf32>
    %6 = vector.extract_strided_slice %1 {offsets = [4, 0], sizes = [1, 32], strides = [1, 1]} : vector<10x128xf32> to vector<1x32xf32>
    %7 = vector.extract_strided_slice %1 {offsets = [5, 0], sizes = [1, 32], strides = [1, 1]} : vector<10x128xf32> to vector<1x32xf32>
    %8 = vector.extract_strided_slice %1 {offsets = [6, 0], sizes = [1, 32], strides = [1, 1]} : vector<10x128xf32> to vector<1x32xf32>
    %9 = vector.extract_strided_slice %1 {offsets = [7, 0], sizes = [1, 32], strides = [1, 1]} : vector<10x128xf32> to vector<1x32xf32>
    %10 = vector.extract_strided_slice %1 {offsets = [8, 0], sizes = [1, 128], strides = [1, 1]} : vector<10x128xf32> to vector<1x128xf32>
    %11 = vector.extract_strided_slice %1 {offsets = [9, 0], sizes = [1, 96], strides = [1, 1]} : vector<10x128xf32> to vector<1x96xf32>
    %cst = arith.constant dense<0.000000e+00> : vector<8xf32>
    %12 = vector.multi_reduction <add>, %0, %cst [1] : vector<8x32xf32> to vector<8xf32>
    %13 = vector.shape_cast %12 : vector<8xf32> to vector<8x1xf32>
    %cst_3 = arith.constant 3.200000e+01 : f32
    %14 = vector.broadcast %cst_3 : f32 to vector<8x1xf32>
    %15 = arith.divf %13, %14 : vector<8x1xf32>
    %16 = vector.broadcast %15 : vector<8x1xf32> to vector<8x32xf32>
    %17 = arith.subf %0, %16 : vector<8x32xf32>
    %18 = arith.mulf %17, %17 : vector<8x32xf32>
    %cst_4 = arith.constant dense<0.000000e+00> : vector<8xf32>
    %19 = vector.multi_reduction <add>, %18, %cst_4 [1] : vector<8x32xf32> to vector<8xf32>
    %20 = vector.shape_cast %19 : vector<8xf32> to vector<8x1xf32>
    %cst_5 = arith.constant 3.200000e+01 : f32
    %21 = vector.broadcast %cst_5 : f32 to vector<8x1xf32>
    %22 = arith.divf %20, %21 : vector<8x1xf32>
    %23 = vector.broadcast %15 : vector<8x1xf32> to vector<8x32xf32>
    %24 = arith.subf %0, %23 : vector<8x32xf32>
    %cst_6 = arith.constant 9.99999974E-6 : f32
    %25 = vector.broadcast %cst_6 : f32 to vector<8x1xf32>
    %26 = arith.addf %22, %25 : vector<8x1xf32>
    %27 = math.rsqrt %26 : vector<8x1xf32>
    %28 = vector.broadcast %27 : vector<8x1xf32> to vector<8x32xf32>
    %29 = arith.mulf %24, %28 : vector<8x32xf32>
    %30 = vector.broadcast %2 : vector<1x32xf32> to vector<8x32xf32>
    %31 = arith.mulf %29, %30 : vector<8x32xf32>
    %32 = vector.broadcast %3 : vector<1x32xf32> to vector<8x32xf32>
    %33 = arith.addf %31, %32 : vector<8x32xf32>
    %c0_7 = arith.constant 0 : index
    %c0_8 = arith.constant 0 : index
    %34 = vector.load %arg4[%c0_7, %c0_8] : memref<32x96xf32, #tpu.memory_space<vmem>>, vector<32x96xf32>
    %cst_9 = arith.constant dense<0.000000e+00> : vector<8x96xf32>
    %35 = tpu.matmul %33, %34, %cst_9 {dimension_numbers = #tpu.dot_dimension_numbers<[1], [0], [0], [1], [0, 0, 1, 1], [], []>} : vector<8x32xf32>, vector<32x96xf32>, vector<8x96xf32> -> vector<8x96xf32>
    %36 = vector.broadcast %11 : vector<1x96xf32> to vector<8x96xf32>
    %37 = arith.addf %35, %36 : vector<8x96xf32>
    %38 = vector.extract_strided_slice %37 {offsets = [0, 0], sizes = [8, 32], strides = [1, 1]} : vector<8x96xf32> to vector<8x32xf32>
    %39 = vector.extract_strided_slice %37 {offsets = [0, 32], sizes = [8, 32], strides = [1, 1]} : vector<8x96xf32> to vector<8x32xf32>
    %40 = vector.extract_strided_slice %37 {offsets = [0, 64], sizes = [8, 32], strides = [1, 1]} : vector<8x96xf32> to vector<8x32xf32>
    %41 = tpu.iota {dimensions = array<i32: 0>} : vector<8x8xi32>
    %42 = tpu.iota {dimensions = array<i32: 1>} : vector<8x8xi32>
    %43 = arith.cmpi sge, %41, %42 : vector<8x8xi32>
    %44 = vector.extract_strided_slice %38 {offsets = [0, 0], sizes = [8, 8], strides = [1, 1]} : vector<8x32xf32> to vector<8x8xf32>
    %45 = vector.extract_strided_slice %39 {offsets = [0, 0], sizes = [8, 8], strides = [1, 1]} : vector<8x32xf32> to vector<8x8xf32>
    %46 = vector.extract_strided_slice %40 {offsets = [0, 0], sizes = [8, 8], strides = [1, 1]} : vector<8x32xf32> to vector<8x8xf32>
    %47 = tpu.transpose %45, [1, 0] : vector<8x8xf32> -> vector<8x8xf32>
    %cst_10 = arith.constant dense<0.000000e+00> : vector<8x8xf32>
    %48 = tpu.matmul %44, %47, %cst_10 {dimension_numbers = #tpu.dot_dimension_numbers<[1], [0], [0], [1], [0, 0, 1, 1], [], []>} : vector<8x8xf32>, vector<8x8xf32>, vector<8x8xf32> -> vector<8x8xf32>
    %cst_11 = arith.constant 0.353553385 : f32
    %49 = vector.broadcast %cst_11 : f32 to vector<8x8xf32>
    %50 = arith.mulf %48, %49 : vector<8x8xf32>
    %cst_12 = arith.constant -1.000000e+09 : f32
    %51 = vector.broadcast %cst_12 : f32 to vector<8x8xf32>
    %52 = arith.select %43, %50, %51 : vector<8x8xi1>, vector<8x8xf32>
    %cst_13 = arith.constant dense<0xFF800000> : vector<8xf32>
    %53 = vector.multi_reduction <maximumf>, %52, %cst_13 [1] : vector<8x8xf32> to vector<8xf32>
    %54 = vector.shape_cast %53 : vector<8xf32> to vector<8x1xf32>
    %55 = vector.broadcast %54 : vector<8x1xf32> to vector<8x8xf32>
    %56 = arith.subf %52, %55 : vector<8x8xf32>
    %57 = math.exp %56 : vector<8x8xf32>
    %cst_14 = arith.constant dense<0.000000e+00> : vector<8xf32>
    %58 = vector.multi_reduction <add>, %57, %cst_14 [1] : vector<8x8xf32> to vector<8xf32>
    %59 = vector.shape_cast %58 : vector<8xf32> to vector<8x1xf32>
    %60 = tpu.reciprocal %59 {approx = true} : vector<8x1xf32> -> vector<8x1xf32>
    %61 = vector.broadcast %60 : vector<8x1xf32> to vector<8x8xf32>
    %62 = arith.mulf %57, %61 : vector<8x8xf32>
    %cst_15 = arith.constant dense<0.000000e+00> : vector<8x8xf32>
    %63 = tpu.matmul %62, %46, %cst_15 {dimension_numbers = #tpu.dot_dimension_numbers<[1], [0], [0], [1], [0, 0, 1, 1], [], []>} : vector<8x8xf32>, vector<8x8xf32>, vector<8x8xf32> -> vector<8x8xf32>
    %64 = vector.extract_strided_slice %38 {offsets = [0, 8], sizes = [8, 8], strides = [1, 1]} : vector<8x32xf32> to vector<8x8xf32>
    %65 = vector.extract_strided_slice %39 {offsets = [0, 8], sizes = [8, 8], strides = [1, 1]} : vector<8x32xf32> to vector<8x8xf32>
    %66 = vector.extract_strided_slice %40 {offsets = [0, 8], sizes = [8, 8], strides = [1, 1]} : vector<8x32xf32> to vector<8x8xf32>
    %67 = tpu.transpose %65, [1, 0] : vector<8x8xf32> -> vector<8x8xf32>
    %cst_16 = arith.constant dense<0.000000e+00> : vector<8x8xf32>
    %68 = tpu.matmul %64, %67, %cst_16 {dimension_numbers = #tpu.dot_dimension_numbers<[1], [0], [0], [1], [0, 0, 1, 1], [], []>} : vector<8x8xf32>, vector<8x8xf32>, vector<8x8xf32> -> vector<8x8xf32>
    %cst_17 = arith.constant 0.353553385 : f32
    %69 = vector.broadcast %cst_17 : f32 to vector<8x8xf32>
    %70 = arith.mulf %68, %69 : vector<8x8xf32>
    %cst_18 = arith.constant -1.000000e+09 : f32
    %71 = vector.broadcast %cst_18 : f32 to vector<8x8xf32>
    %72 = arith.select %43, %70, %71 : vector<8x8xi1>, vector<8x8xf32>
    %cst_19 = arith.constant dense<0xFF800000> : vector<8xf32>
    %73 = vector.multi_reduction <maximumf>, %72, %cst_19 [1] : vector<8x8xf32> to vector<8xf32>
    %74 = vector.shape_cast %73 : vector<8xf32> to vector<8x1xf32>
    %75 = vector.broadcast %74 : vector<8x1xf32> to vector<8x8xf32>
    %76 = arith.subf %72, %75 : vector<8x8xf32>
    %77 = math.exp %76 : vector<8x8xf32>
    %cst_20 = arith.constant dense<0.000000e+00> : vector<8xf32>
    %78 = vector.multi_reduction <add>, %77, %cst_20 [1] : vector<8x8xf32> to vector<8xf32>
    %79 = vector.shape_cast %78 : vector<8xf32> to vector<8x1xf32>
    %80 = tpu.reciprocal %79 {approx = true} : vector<8x1xf32> -> vector<8x1xf32>
    %81 = vector.broadcast %80 : vector<8x1xf32> to vector<8x8xf32>
    %82 = arith.mulf %77, %81 : vector<8x8xf32>
    %cst_21 = arith.constant dense<0.000000e+00> : vector<8x8xf32>
    %83 = tpu.matmul %82, %66, %cst_21 {dimension_numbers = #tpu.dot_dimension_numbers<[1], [0], [0], [1], [0, 0, 1, 1], [], []>} : vector<8x8xf32>, vector<8x8xf32>, vector<8x8xf32> -> vector<8x8xf32>
    %84 = vector.extract_strided_slice %38 {offsets = [0, 16], sizes = [8, 8], strides = [1, 1]} : vector<8x32xf32> to vector<8x8xf32>
    %85 = vector.extract_strided_slice %39 {offsets = [0, 16], sizes = [8, 8], strides = [1, 1]} : vector<8x32xf32> to vector<8x8xf32>
    %86 = vector.extract_strided_slice %40 {offsets = [0, 16], sizes = [8, 8], strides = [1, 1]} : vector<8x32xf32> to vector<8x8xf32>
    %87 = tpu.transpose %85, [1, 0] : vector<8x8xf32> -> vector<8x8xf32>
    %cst_22 = arith.constant dense<0.000000e+00> : vector<8x8xf32>
    %88 = tpu.matmul %84, %87, %cst_22 {dimension_numbers = #tpu.dot_dimension_numbers<[1], [0], [0], [1], [0, 0, 1, 1], [], []>} : vector<8x8xf32>, vector<8x8xf32>, vector<8x8xf32> -> vector<8x8xf32>
    %cst_23 = arith.constant 0.353553385 : f32
    %89 = vector.broadcast %cst_23 : f32 to vector<8x8xf32>
    %90 = arith.mulf %88, %89 : vector<8x8xf32>
    %cst_24 = arith.constant -1.000000e+09 : f32
    %91 = vector.broadcast %cst_24 : f32 to vector<8x8xf32>
    %92 = arith.select %43, %90, %91 : vector<8x8xi1>, vector<8x8xf32>
    %cst_25 = arith.constant dense<0xFF800000> : vector<8xf32>
    %93 = vector.multi_reduction <maximumf>, %92, %cst_25 [1] : vector<8x8xf32> to vector<8xf32>
    %94 = vector.shape_cast %93 : vector<8xf32> to vector<8x1xf32>
    %95 = vector.broadcast %94 : vector<8x1xf32> to vector<8x8xf32>
    %96 = arith.subf %92, %95 : vector<8x8xf32>
    %97 = math.exp %96 : vector<8x8xf32>
    %cst_26 = arith.constant dense<0.000000e+00> : vector<8xf32>
    %98 = vector.multi_reduction <add>, %97, %cst_26 [1] : vector<8x8xf32> to vector<8xf32>
    %99 = vector.shape_cast %98 : vector<8xf32> to vector<8x1xf32>
    %100 = tpu.reciprocal %99 {approx = true} : vector<8x1xf32> -> vector<8x1xf32>
    %101 = vector.broadcast %100 : vector<8x1xf32> to vector<8x8xf32>
    %102 = arith.mulf %97, %101 : vector<8x8xf32>
    %cst_27 = arith.constant dense<0.000000e+00> : vector<8x8xf32>
    %103 = tpu.matmul %102, %86, %cst_27 {dimension_numbers = #tpu.dot_dimension_numbers<[1], [0], [0], [1], [0, 0, 1, 1], [], []>} : vector<8x8xf32>, vector<8x8xf32>, vector<8x8xf32> -> vector<8x8xf32>
    %104 = vector.extract_strided_slice %38 {offsets = [0, 24], sizes = [8, 8], strides = [1, 1]} : vector<8x32xf32> to vector<8x8xf32>
    %105 = vector.extract_strided_slice %39 {offsets = [0, 24], sizes = [8, 8], strides = [1, 1]} : vector<8x32xf32> to vector<8x8xf32>
    %106 = vector.extract_strided_slice %40 {offsets = [0, 24], sizes = [8, 8], strides = [1, 1]} : vector<8x32xf32> to vector<8x8xf32>
    %107 = tpu.transpose %105, [1, 0] : vector<8x8xf32> -> vector<8x8xf32>
    %cst_28 = arith.constant dense<0.000000e+00> : vector<8x8xf32>
    %108 = tpu.matmul %104, %107, %cst_28 {dimension_numbers = #tpu.dot_dimension_numbers<[1], [0], [0], [1], [0, 0, 1, 1], [], []>} : vector<8x8xf32>, vector<8x8xf32>, vector<8x8xf32> -> vector<8x8xf32>
    %cst_29 = arith.constant 0.353553385 : f32
    %109 = vector.broadcast %cst_29 : f32 to vector<8x8xf32>
    %110 = arith.mulf %108, %109 : vector<8x8xf32>
    %cst_30 = arith.constant -1.000000e+09 : f32
    %111 = vector.broadcast %cst_30 : f32 to vector<8x8xf32>
    %112 = arith.select %43, %110, %111 : vector<8x8xi1>, vector<8x8xf32>
    %cst_31 = arith.constant dense<0xFF800000> : vector<8xf32>
    %113 = vector.multi_reduction <maximumf>, %112, %cst_31 [1] : vector<8x8xf32> to vector<8xf32>
    %114 = vector.shape_cast %113 : vector<8xf32> to vector<8x1xf32>
    %115 = vector.broadcast %114 : vector<8x1xf32> to vector<8x8xf32>
    %116 = arith.subf %112, %115 : vector<8x8xf32>
    %117 = math.exp %116 : vector<8x8xf32>
    %cst_32 = arith.constant dense<0.000000e+00> : vector<8xf32>
    %118 = vector.multi_reduction <add>, %117, %cst_32 [1] : vector<8x8xf32> to vector<8xf32>
    %119 = vector.shape_cast %118 : vector<8xf32> to vector<8x1xf32>
    %120 = tpu.reciprocal %119 {approx = true} : vector<8x1xf32> -> vector<8x1xf32>
    %121 = vector.broadcast %120 : vector<8x1xf32> to vector<8x8xf32>
    %122 = arith.mulf %117, %121 : vector<8x8xf32>
    %cst_33 = arith.constant dense<0.000000e+00> : vector<8x8xf32>
    %123 = tpu.matmul %122, %106, %cst_33 {dimension_numbers = #tpu.dot_dimension_numbers<[1], [0], [0], [1], [0, 0, 1, 1], [], []>} : vector<8x8xf32>, vector<8x8xf32>, vector<8x8xf32> -> vector<8x8xf32>
    %124 = tpu.concatenate %63, %83, %103, %123 in 1 : vector<8x8xf32>, vector<8x8xf32>, vector<8x8xf32>, vector<8x8xf32> -> vector<8x32xf32>
    %c0_34 = arith.constant 0 : index
    %c0_35 = arith.constant 0 : index
    %125 = vector.load %arg7[%c0_34, %c0_35] : memref<32x64xf32, #tpu.memory_space<vmem>>, vector<32x64xf32>
    %126 = vector.extract_strided_slice %125 {offsets = [0, 0], sizes = [32, 32], strides = [1, 1]} : vector<32x64xf32> to vector<32x32xf32>
    %127 = vector.extract_strided_slice %125 {offsets = [0, 32], sizes = [32, 32], strides = [1, 1]} : vector<32x64xf32> to vector<32x32xf32>
    %cst_36 = arith.constant dense<0.000000e+00> : vector<8x32xf32>
    %128 = tpu.matmul %124, %126, %cst_36 {dimension_numbers = #tpu.dot_dimension_numbers<[1], [0], [0], [1], [0, 0, 1, 1], [], []>} : vector<8x32xf32>, vector<32x32xf32>, vector<8x32xf32> -> vector<8x32xf32>
    %129 = arith.addf %0, %128 : vector<8x32xf32>
    %130 = vector.broadcast %4 : vector<1x32xf32> to vector<8x32xf32>
    %131 = arith.addf %129, %130 : vector<8x32xf32>
    %cst_37 = arith.constant dense<0.000000e+00> : vector<8xf32>
    %132 = vector.multi_reduction <add>, %131, %cst_37 [1] : vector<8x32xf32> to vector<8xf32>
    %133 = vector.shape_cast %132 : vector<8xf32> to vector<8x1xf32>
    %cst_38 = arith.constant 3.200000e+01 : f32
    %134 = vector.broadcast %cst_38 : f32 to vector<8x1xf32>
    %135 = arith.divf %133, %134 : vector<8x1xf32>
    %136 = vector.broadcast %135 : vector<8x1xf32> to vector<8x32xf32>
    %137 = arith.subf %131, %136 : vector<8x32xf32>
    %138 = arith.mulf %137, %137 : vector<8x32xf32>
    %cst_39 = arith.constant dense<0.000000e+00> : vector<8xf32>
    %139 = vector.multi_reduction <add>, %138, %cst_39 [1] : vector<8x32xf32> to vector<8xf32>
    %140 = vector.shape_cast %139 : vector<8xf32> to vector<8x1xf32>
    %cst_40 = arith.constant 3.200000e+01 : f32
    %141 = vector.broadcast %cst_40 : f32 to vector<8x1xf32>
    %142 = arith.divf %140, %141 : vector<8x1xf32>
    %143 = vector.broadcast %135 : vector<8x1xf32> to vector<8x32xf32>
    %144 = arith.subf %131, %143 : vector<8x32xf32>
    %cst_41 = arith.constant 9.99999974E-6 : f32
    %145 = vector.broadcast %cst_41 : f32 to vector<8x1xf32>
    %146 = arith.addf %142, %145 : vector<8x1xf32>
    %147 = math.rsqrt %146 : vector<8x1xf32>
    %148 = vector.broadcast %147 : vector<8x1xf32> to vector<8x32xf32>
    %149 = arith.mulf %144, %148 : vector<8x32xf32>
    %150 = vector.broadcast %5 : vector<1x32xf32> to vector<8x32xf32>
    %151 = arith.mulf %149, %150 : vector<8x32xf32>
    %152 = vector.broadcast %6 : vector<1x32xf32> to vector<8x32xf32>
    %153 = arith.addf %151, %152 : vector<8x32xf32>
    %c0_42 = arith.constant 0 : index
    %c0_43 = arith.constant 0 : index
    %154 = vector.load %arg5[%c0_42, %c0_43] : memref<32x128xf32, #tpu.memory_space<vmem>>, vector<32x128xf32>
    %cst_44 = arith.constant dense<0.000000e+00> : vector<8x128xf32>
    %155 = tpu.matmul %153, %154, %cst_44 {dimension_numbers = #tpu.dot_dimension_numbers<[1], [0], [0], [1], [0, 0, 1, 1], [], []>} : vector<8x32xf32>, vector<32x128xf32>, vector<8x128xf32> -> vector<8x128xf32>
    %156 = vector.broadcast %10 : vector<1x128xf32> to vector<8x128xf32>
    %157 = arith.addf %155, %156 : vector<8x128xf32>
    %158 = arith.mulf %157, %157 : vector<8x128xf32>
    %159 = arith.mulf %157, %158 : vector<8x128xf32>
    %cst_45 = arith.constant 4.471500e-02 : f32
    %160 = vector.broadcast %cst_45 : f32 to vector<8x128xf32>
    %161 = arith.mulf %160, %159 : vector<8x128xf32>
    %162 = arith.addf %157, %161 : vector<8x128xf32>
    %cst_46 = arith.constant 0.797884583 : f32
    %163 = vector.broadcast %cst_46 : f32 to vector<8x128xf32>
    %164 = arith.mulf %163, %162 : vector<8x128xf32>
    %165 = math.tanh %164 : vector<8x128xf32>
    %cst_47 = arith.constant 1.000000e+00 : f32
    %166 = vector.broadcast %cst_47 : f32 to vector<8x128xf32>
    %167 = arith.addf %166, %165 : vector<8x128xf32>
    %cst_48 = arith.constant 5.000000e-01 : f32
    %168 = vector.broadcast %cst_48 : f32 to vector<8x128xf32>
    %169 = arith.mulf %168, %167 : vector<8x128xf32>
    %170 = arith.mulf %157, %169 : vector<8x128xf32>
    %c0_49 = arith.constant 0 : index
    %c0_50 = arith.constant 0 : index
    %171 = vector.load %arg6[%c0_49, %c0_50] : memref<128x32xf32, #tpu.memory_space<vmem>>, vector<128x32xf32>
    %cst_51 = arith.constant dense<0.000000e+00> : vector<8x32xf32>
    %172 = tpu.matmul %170, %171, %cst_51 {dimension_numbers = #tpu.dot_dimension_numbers<[1], [0], [0], [1], [0, 0, 1, 1], [], []>} : vector<8x128xf32>, vector<128x32xf32>, vector<8x32xf32> -> vector<8x32xf32>
    %173 = arith.addf %131, %172 : vector<8x32xf32>
    %174 = vector.broadcast %7 : vector<1x32xf32> to vector<8x32xf32>
    %175 = arith.addf %173, %174 : vector<8x32xf32>
    %cst_52 = arith.constant dense<0.000000e+00> : vector<8xf32>
    %176 = vector.multi_reduction <add>, %175, %cst_52 [1] : vector<8x32xf32> to vector<8xf32>
    %177 = vector.shape_cast %176 : vector<8xf32> to vector<8x1xf32>
    %cst_53 = arith.constant 3.200000e+01 : f32
    %178 = vector.broadcast %cst_53 : f32 to vector<8x1xf32>
    %179 = arith.divf %177, %178 : vector<8x1xf32>
    %180 = vector.broadcast %179 : vector<8x1xf32> to vector<8x32xf32>
    %181 = arith.subf %175, %180 : vector<8x32xf32>
    %182 = arith.mulf %181, %181 : vector<8x32xf32>
    %cst_54 = arith.constant dense<0.000000e+00> : vector<8xf32>
    %183 = vector.multi_reduction <add>, %182, %cst_54 [1] : vector<8x32xf32> to vector<8xf32>
    %184 = vector.shape_cast %183 : vector<8xf32> to vector<8x1xf32>
    %cst_55 = arith.constant 3.200000e+01 : f32
    %185 = vector.broadcast %cst_55 : f32 to vector<8x1xf32>
    %186 = arith.divf %184, %185 : vector<8x1xf32>
    %187 = vector.broadcast %179 : vector<8x1xf32> to vector<8x32xf32>
    %188 = arith.subf %175, %187 : vector<8x32xf32>
    %cst_56 = arith.constant 9.99999974E-6 : f32
    %189 = vector.broadcast %cst_56 : f32 to vector<8x1xf32>
    %190 = arith.addf %186, %189 : vector<8x1xf32>
    %191 = math.rsqrt %190 : vector<8x1xf32>
    %192 = vector.broadcast %191 : vector<8x1xf32> to vector<8x32xf32>
    %193 = arith.mulf %188, %192 : vector<8x32xf32>
    %194 = vector.broadcast %8 : vector<1x32xf32> to vector<8x32xf32>
    %195 = arith.mulf %193, %194 : vector<8x32xf32>
    %196 = vector.broadcast %9 : vector<1x32xf32> to vector<8x32xf32>
    %197 = arith.addf %195, %196 : vector<8x32xf32>
    %c0_57 = arith.constant 0 : index
    %c0_58 = arith.constant 0 : index
    %198 = vector.load %arg8[%c0_57, %c0_58] : memref<8x32xf32, #tpu.memory_space<vmem>>, vector<8x32xf32>
    tpu.vector_store %arg8[%c0_57, %c0_58], %197 {strides = array<i32>} : memref<8x32xf32, #tpu.memory_space<vmem>>, vector<8x32xf32>,
    %c0_59 = arith.constant 0 : index
    %199 = memref.load %arg1[%c0_59] : memref<1xi32, #tpu.memory_space<smem>>
    %200 = tpu.iota {dimensions = array<i32: 1>} : vector<1x8xi32>
    %201 = vector.broadcast %199 : i32 to vector<1x8xi32>
    %202 = arith.cmpi eq, %200, %201 : vector<1x8xi32>
    %203 = arith.extui %202 : vector<1x8xi1> to vector<1x8xi32>
    %204 = arith.sitofp %203 : vector<1x8xi32> to vector<1x8xf32>
    %cst_60 = arith.constant dense<0.000000e+00> : vector<1x32xf32>
    %205 = tpu.matmul %204, %197, %cst_60 {dimension_numbers = #tpu.dot_dimension_numbers<[1], [0], [0], [1], [0, 0, 1, 1], [], []>} : vector<1x8xf32>, vector<8x32xf32>, vector<1x32xf32> -> vector<1x32xf32>
    %cst_61 = arith.constant dense<0.000000e+00> : vector<1x32xf32>
    %206 = tpu.matmul %205, %127, %cst_61 {dimension_numbers = #tpu.dot_dimension_numbers<[1], [0], [0], [1], [0, 0, 1, 1], [], []>} : vector<1x32xf32>, vector<32x32xf32>, vector<1x32xf32> -> vector<1x32xf32>
    %c0_62 = arith.constant 0 : index
    %c0_63 = arith.constant 0 : index
    %207 = vector.load %arg9[%c0_62, %c0_63] : memref<1x32xf32, #tpu.memory_space<vmem>>, vector<1x32xf32>
    tpu.vector_store %arg9[%c0_62, %c0_63], %206 {strides = array<i32>} : memref<1x32xf32, #tpu.memory_space<vmem>>, vector<1x32xf32>,
    return
  }
  func.func @transform_0(%arg0: i32, %arg1: memref<1xi32, #tpu.memory_space<smem>>) -> (i32, i32) {
    %c0_i32 = arith.constant 0 : i32
    %c0_i32_0 = arith.constant 0 : i32
    %c0_i32_1 = arith.constant 0 : i32
    return %c0_i32, %c0_i32_0 : i32, i32
  }
  func.func @transform_1(%arg0: i32, %arg1: memref<1xi32, #tpu.memory_space<smem>>) -> (i32, i32) {
    %c0_i32 = arith.constant 0 : i32
    %c0_i32_0 = arith.constant 0 : i32
    %c0_i32_1 = arith.constant 0 : i32
    return %c0_i32, %c0_i32_0 : i32, i32
  }
  func.func @transform_2(%arg0: i32, %arg1: memref<1xi32, #tpu.memory_space<smem>>) -> (i32, i32) {
    %c0_i32 = arith.constant 0 : i32
    %c0_i32_0 = arith.constant 0 : i32
    %c0_i32_1 = arith.constant 0 : i32
    return %c0_i32, %c0_i32_0 : i32, i32
  }
  func.func @transform_3(%arg0: i32, %arg1: memref<1xi32, #tpu.memory_space<smem>>) -> (i32, i32) {
    %c0_i32 = arith.constant 0 : i32
    %c0_i32_0 = arith.constant 0 : i32
    %c0_i32_1 = arith.constant 0 : i32
    return %c0_i32, %c0_i32_0 : i32, i32
  }
  func.func @transform_4(%arg0: i32, %arg1: memref<1xi32, #tpu.memory_space<smem>>) -> (i32, i32) {
    %c0_i32 = arith.constant 0 : i32
    %c0_i32_0 = arith.constant 0 : i32
    %c0_i32_1 = arith.constant 0 : i32
    return %c0_i32, %c0_i32_0 : i32, i32
  }
  func.func @transform_5(%arg0: i32, %arg1: memref<1xi32, #tpu.memory_space<smem>>) -> (i32, i32) {
    %c0_i32 = arith.constant 0 : i32
    %c0_i32_0 = arith.constant 0 : i32
    %c0_i32_1 = arith.constant 0 : i32
    return %c0_i32, %c0_i32_0 : i32, i32
  }
  func.func @transform_6(%arg0: i32, %arg1: memref<1xi32, #tpu.memory_space<smem>>) -> (i32, i32) {
    %c0_i32 = arith.constant 0 : i32
    %c0_i32_0 = arith.constant 0 : i32
    %c0_i32_1 = arith.constant 0 : i32
    return %c0_i32, %c0_i32_0 : i32, i32
  }
  func.func @transform_7(%arg0: i32, %arg1: memref<1xi32, #tpu.memory_space<smem>>) -> (i32, i32) {
    %c0_i32 = arith.constant 0 : i32
    %c0_i32_0 = arith.constant 0 : i32
    %c0_i32_1 = arith.constant 0 : i32
    return %c0_i32, %c0_i32_0 : i32, i32
  }
}

</mosaic_0001>

<llo_original>
// kernel: tpu_custom_call.1
$region0: #{tpu_custom_call.1}
  #allocation0 [shape = 'u32[]', space=smem, size = 0x4, offset = 0x4, fixed_abs, tag = 'smem constant byte address 0x4 - core index']
  #allocation1 [shape = 'u32[72,128]{1,0:T(1,128)}', space=vmem, size = 0x9000, scoped, tag = 'internal scratch']
  #allocation2 [shape = 's32[1]{0}', space=sflag, size = 0x4, scoped, tag = 'scoped memory for tpu_custom_call.1']
  #allocation3 [shape = 's32[1]{0:T(128)S(6)}', space=smem, size = 0x200, scoped, tag = 'prefetched SMEM operand 0']
  %s0 = inlined_call_operand.<no memory space> [shape: s32[1], index: 0, kind: input, shape index: {}]
  %s1 = inlined_call_operand.vmem [shape: f32[8,32], index: 1, kind: input, shape index: {}]
  %s2 = inlined_call_operand.vmem [shape: f32[10,128], index: 2, kind: input, shape index: {}]
  %s3 = inlined_call_operand.vmem [shape: f32[32,96], index: 3, kind: input, shape index: {}]
  %s4 = inlined_call_operand.vmem [shape: f32[32,128], index: 4, kind: input, shape index: {}]
  %s5 = inlined_call_operand.vmem [shape: f32[128,32], index: 5, kind: input, shape index: {}]
  %s6 = inlined_call_operand.vmem [shape: f32[32,64], index: 6, kind: input, shape index: {}]
  %s7 = inlined_call_operand.hbm [shape: f32[8,32], index: 7, kind: output, shape index: {0}]
  %s8 = inlined_call_operand.hbm [shape: f32[1,32], index: 8, kind: output, shape index: {1}]
  %9 = xla_tuple %s7, %s8
  %s10 = sld [smem:[#allocation0]]
  $region42: #{tpu_custom_call.1} parent=0
    _
  %s12 = ssub.s32 1, %s10
  %s13 = scalar_select 0, %s12, %s10
  %14 = sst [smem:[#allocation3]] %s0
  $region1: #{tpu_custom_call.1} parent=0
    #allocation4 [shape = 'u8[4096]{0}', space=vmem, size = 0x1000, scoped, tag = 'output window, operand 0, single buffered']
    #allocation5 [shape = 's32[1]{0}', space=sflag, size = 0x4, scoped, tag = 'scoped memory for tpu_custom_call.1']
    #allocation6 [shape = 'u8[512]{0}', space=vmem, size = 0x400, scoped, tag = 'output window, operand 1, single buffered']
    #allocation7 [shape = 's32[1]{0}', space=sflag, size = 0x4, scoped, tag = 'scoped memory for tpu_custom_call.1']
    %15 = vsyncpa [#allocation5], 0
    %16 = vsyncpa [#allocation7], 0
    // Predicated region
    $region2: #{tpu_custom_call.1} parent=1 // pred_check
      _
    $region3: #{tpu_custom_call.1} parent=1 // pred_check_branch
      %18 = sbr.rel (0) target = $region5
    $region4: #{tpu_custom_call.1} parent=1 // pred_region
      _
    $region5: #{tpu_custom_call.1} parent=1 // pred_fallthru
      _
    // Predicated region
    $region6: #{tpu_custom_call.1} parent=1 // pred_check
      _
    $region7: #{tpu_custom_call.1} parent=1 // pred_check_branch
      %20 = sbr.rel (0) target = $region9
    $region8: #{tpu_custom_call.1} parent=1 // pred_region
      _
    $region9: #{tpu_custom_call.1} parent=1 // pred_fallthru
      _
    // Predicated region
    $region10: #{tpu_custom_call.1} parent=1 // pred_check
      _
    $region11: #{tpu_custom_call.1} parent=1 // pred_check_branch
      %22 = sbr.rel (0) target = $region13
    $region12: #{tpu_custom_call.1} parent=1 // pred_region
      _
    $region13: #{tpu_custom_call.1} parent=1 // pred_fallthru
      _
    // Predicated region
    $region14: #{tpu_custom_call.1} parent=1 // pred_check
      _
    $region15: #{tpu_custom_call.1} parent=1 // pred_check_branch
      %24 = sbr.rel (0) target = $region17
    $region16: #{tpu_custom_call.1} parent=1 // pred_region
      _
    $region17: #{tpu_custom_call.1} parent=1 // pred_fallthru
      _
    // Predicated region
    $region18: #{tpu_custom_call.1} parent=1 // pred_check
      _
    $region19: #{tpu_custom_call.1} parent=1 // pred_check_branch
      %26 = sbr.rel (0) target = $region21
    $region20: #{tpu_custom_call.1} parent=1 // pred_region
      _
    $region21: #{tpu_custom_call.1} parent=1 // pred_fallthru
      _
    // Predicated region
    $region22: #{tpu_custom_call.1} parent=1 // pred_check
      _
    $region23: #{tpu_custom_call.1} parent=1 // pred_check_branch
      %28 = sbr.rel (0) target = $region25
    $region24: #{tpu_custom_call.1} parent=1 // pred_region
      _
    $region25: #{tpu_custom_call.1} parent=1 // pred_fallthru
      _
    %v29 = vld [vmem:[%s1] sm:$0xff]
    %v30 = vld [vmem:[%s2] sm:$0xff]
    %v31 = vld [vmem:[%s2 + $0x8] sm:$0x3]
    %vm32 = vcmask 261120
    %v33 = vsel %vm32, %v29, 0.0
    %34 = vadd.xlane.f32.xlu0 %v33
    %v35 = vpop.xlane.xlu0 %34
    %v36 = vrcp.pop 32.0
    %v37 = vmul.f32 32.0, %v36
    %v38 = vsub.f32 1.0, %v37
    %v39 = vmul.f32 %v36, %v38
    %v40 = vadd.f32 %v36, %v39
    %vm41 = vweird.f32 %v36
    %v42 = vsel %vm41, %v36, %v40
    %v43 = vmul.f32 %v35, %v42
    %v44 = vsub.f32 %v29, %v43
    %v45 = vmul.f32 %v44, %v44
    %v46 = vsel %vm32, %v45, 0.0
    %47 = vadd.xlane.f32.xlu0 %v46
    %v48 = vpop.xlane.xlu0 %47
    %v49 = vmul.f32 %v48, %v42
    %v50 = vadd.f32 %v49, 1e-05
    %v51 = vrsqrt.pop %v50
    %v52 = vmul.f32 %v51, %v50
    %v53 = vmul.f32 %v52, %v51
    %v54 = vmul.f32 0.5, %v53
    %v55 = vsub.f32 1.5, %v54
    %v56 = vmul.f32 %v51, %v55
    %vm57 = vweird.f32 %v50
    %vm58 = vweird.f32 %v51
    %vm59 = vmor %vm57, %vm58
    %v60 = vsel %vm59, %v51, %v56
    %v61 = vmul.f32 %v44, %v60
    %v62 = vperm.slane %v30, 0
    %v63 = vmul.f32 %v61, %v62
    %v64 = vperm.slane %v30, 1
    %v65 = vadd.f32 %v63, %v64
    %v66 = vld [vmem:[%s3] sm:$0xff]
    %v67 = vld [vmem:[%s3 + $0x8] sm:$0xff]
    %v68 = vld [vmem:[%s3 + $0x10] sm:$0xff]
    %v69 = vld [vmem:[%s3 + $0x18] sm:$0xff]
    %v70 = vperm.slane %v31, 1
    %v72 = vsel %vm32, %v65, 0
    %74 = vmatpush.msra.mxu0 0.0
    %75 = vmatpush.msra.mxu0 0.0
    %76 = vmatpush.msra.mxu0 0.0
    %77 = vmatpush.msra.mxu0 0.0
    %78 = vmatpush.msra.mxu0 0.0
    %79 = vmatpush.msra.mxu0 0.0
    %80 = vmatpush.msra.mxu0 0.0
    %81 = vmatpush.msra.mxu0 0.0
    %82 = vmatpush.msra.mxu0 0.0
    %83 = vmatpush.msra.mxu0 0.0
    %84 = vmatpush.msra.mxu0 0.0
    %85 = vmatpush.msra.mxu0 0.0
    %86 = vmatpush.msra.mxu0 %v69
    %87 = vmatpush.msra.mxu0 %v68
    %88 = vmatpush.msra.mxu0 %v67
    %89 = vmatpush.msra.mxu0 %v66
    %90 = vmatmul.f32.gmra.mxu0 %v72
    %v91 = vpop.f32.mrf.mxu0
    %v92 = vadd.f32 %v70, %v91
    %93 = vdwg.mxu0
    %v94 = vlaneseq
    %v95 = vshrl.u32 %v94, 7
    %v96 = vlaneseq
    %v97 = vand.u32 %v96, 127
    %vm98 = vcmp.ge.s32.totalorder %v95, %v97
    %100 = vrot.lane.b32.xlu0 %v92, 96
    %v101 = vpop.permute.xlu0 %100
    %vm102 = vcmask 64512
    %v103 = vsel %vm102, %v92, 0
    %v105 = vsel %vm102, %v101, 0
    %107 = vmatpush.xpose.msra.mxu0 0.0
    %108 = vmatpush.xpose.msra.mxu0 0.0
    %109 = vmatpush.xpose.msra.mxu0 0.0
    %110 = vmatpush.xpose.msra.mxu0 0.0
    %111 = vmatpush.xpose.msra.mxu0 0.0
    %112 = vmatpush.xpose.msra.mxu0 0.0
    %113 = vmatpush.xpose.msra.mxu0 0.0
    %114 = vmatpush.xpose.msra.mxu0 0.0
    %115 = vmatpush.xpose.msra.mxu0 0.0
    %116 = vmatpush.xpose.msra.mxu0 0.0
    %117 = vmatpush.xpose.msra.mxu0 0.0
    %118 = vmatpush.xpose.msra.mxu0 0.0
    %119 = vmatpush.xpose.msra.mxu0 0.0
    %120 = vmatpush.xpose.msra.mxu0 0.0
    %121 = vmatpush.xpose.msra.mxu0 0.0
    %122 = vmatpush.xpose.msra.mxu0 %v105
    %123 = vmatmul.f32.gmra.mxu0 %v103
    %v124 = vpop.f32.mrf.mxu0
    %v125 = vadd.f32 0.0, %v124
    %126 = vdwg.mxu0
    %v127 = vmul.f32 %v125, 0.35355338
    %v128 = vsel %vm98, %v127, -1e+09
    %v129 = vsel %vm102, %v128, -inf
    %130 = vmax.xlane.f32.xlu0 %v129
    %v131 = vpop.xlane.xlu0 %130
    %v132 = vsub.f32 %v128, %v131
    %v133 = vmul.f32 %v132, 1.442695
    %v134 = vpow.pop %v133
    %v135 = vsel %vm102, %v134, 0.0
    %136 = vadd.xlane.f32.xlu0 %v135
    %v137 = vpop.xlane.xlu0 %136
    %v138 = vrcp.pop %v137
    %v139 = vmul.f32 %v134, %v138
    %140 = vrot.lane.b32.xlu0 %v92, 64
    %v141 = vpop.permute.xlu0 %140
    %v144 = vsel %vm102, %v139, 0
    %146 = vmatpush.msra.mxu0 0.0
    %147 = vmatpush.msra.mxu0 0.0
    %148 = vmatpush.msra.mxu0 0.0
    %149 = vmatpush.msra.mxu0 0.0
    %150 = vmatpush.msra.mxu0 0.0
    %151 = vmatpush.msra.mxu0 0.0
    %152 = vmatpush.msra.mxu0 0.0
    %153 = vmatpush.msra.mxu0 0.0
    %154 = vmatpush.msra.mxu0 0.0
    %155 = vmatpush.msra.mxu0 0.0
    %156 = vmatpush.msra.mxu0 0.0
    %157 = vmatpush.msra.mxu0 0.0
    %158 = vmatpush.msra.mxu0 0.0
    %159 = vmatpush.msra.mxu0 0.0
    %160 = vmatpush.msra.mxu0 0.0
    %161 = vmatpush.msra.mxu0 %v141
    %162 = vmatmul.f32.gmra.mxu0 %v144
    %v163 = vpop.f32.mrf.mxu0
    %v164 = vadd.f32 0.0, %v163
    %165 = vdwg.mxu0
    %166 = vrot.lane.b32.xlu0 %v92, 120
    %v167 = vpop.permute.xlu0 %166
    %168 = vrot.lane.b32.xlu0 %v92, 88
    %v169 = vpop.permute.xlu0 %168
    %v170 = vsel %vm102, %v167, 0
    %v172 = vsel %vm102, %v169, 0
    %174 = vmatpush.xpose.msra.mxu0 0.0
    %175 = vmatpush.xpose.msra.mxu0 0.0
    %176 = vmatpush.xpose.msra.mxu0 0.0
    %177 = vmatpush.xpose.msra.mxu0 0.0
    %178 = vmatpush.xpose.msra.mxu0 0.0
    %179 = vmatpush.xpose.msra.mxu0 0.0
    %180 = vmatpush.xpose.msra.mxu0 0.0
    %181 = vmatpush.xpose.msra.mxu0 0.0
    %182 = vmatpush.xpose.msra.mxu0 0.0
    %183 = vmatpush.xpose.msra.mxu0 0.0
    %184 = vmatpush.xpose.msra.mxu0 0.0
    %185 = vmatpush.xpose.msra.mxu0 0.0
    %186 = vmatpush.xpose.msra.mxu0 0.0
    %187 = vmatpush.xpose.msra.mxu0 0.0
    %188 = vmatpush.xpose.msra.mxu0 0.0
    %189 = vmatpush.xpose.msra.mxu0 %v172
    %190 = vmatmul.f32.gmra.mxu0 %v170
    %v191 = vpop.f32.mrf.mxu0
    %v192 = vadd.f32 0.0, %v191
    %193 = vdwg.mxu0
    %v194 = vmul.f32 %v192, 0.35355338
    %v195 = vsel %vm98, %v194, -1e+09
    %v196 = vsel %vm102, %v195, -inf
    %197 = vmax.xlane.f32.xlu0 %v196
    %v198 = vpop.xlane.xlu0 %197
    %v199 = vsub.f32 %v195, %v198
    %v200 = vmul.f32 %v199, 1.442695
    %v201 = vpow.pop %v200
    %v202 = vsel %vm102, %v201, 0.0
    %203 = vadd.xlane.f32.xlu0 %v202
    %v204 = vpop.xlane.xlu0 %203
    %v205 = vrcp.pop %v204
    %v206 = vmul.f32 %v201, %v205
    %207 = vrot.lane.b32.xlu0 %v92, 56
    %v208 = vpop.permute.xlu0 %207
    %v211 = vsel %vm102, %v206, 0
    %213 = vmatpush.msra.mxu0 0.0
    %214 = vmatpush.msra.mxu0 0.0
    %215 = vmatpush.msra.mxu0 0.0
    %216 = vmatpush.msra.mxu0 0.0
    %217 = vmatpush.msra.mxu0 0.0
    %218 = vmatpush.msra.mxu0 0.0
    %219 = vmatpush.msra.mxu0 0.0
    %220 = vmatpush.msra.mxu0 0.0
    %221 = vmatpush.msra.mxu0 0.0
    %222 = vmatpush.msra.mxu0 0.0
    %223 = vmatpush.msra.mxu0 0.0
    %224 = vmatpush.msra.mxu0 0.0
    %225 = vmatpush.msra.mxu0 0.0
    %226 = vmatpush.msra.mxu0 0.0
    %227 = vmatpush.msra.mxu0 0.0
    %228 = vmatpush.msra.mxu0 %v208
    %229 = vmatmul.f32.gmra.mxu0 %v211
    %v230 = vpop.f32.mrf.mxu0
    %v231 = vadd.f32 0.0, %v230
    %232 = vdwg.mxu0
    %233 = vrot.lane.b32.xlu0 %v92, 112
    %v234 = vpop.permute.xlu0 %233
    %235 = vrot.lane.b32.xlu0 %v92, 80
    %v236 = vpop.permute.xlu0 %235
    %v237 = vsel %vm102, %v234, 0
    %v239 = vsel %vm102, %v236, 0
    %241 = vmatpush.xpose.msra.mxu0 0.0
    %242 = vmatpush.xpose.msra.mxu0 0.0
    %243 = vmatpush.xpose.msra.mxu0 0.0
    %244 = vmatpush.xpose.msra.mxu0 0.0
    %245 = vmatpush.xpose.msra.mxu0 0.0
    %246 = vmatpush.xpose.msra.mxu0 0.0
    %247 = vmatpush.xpose.msra.mxu0 0.0
    %248 = vmatpush.xpose.msra.mxu0 0.0
    %249 = vmatpush.xpose.msra.mxu0 0.0
    %250 = vmatpush.xpose.msra.mxu0 0.0
    %251 = vmatpush.xpose.msra.mxu0 0.0
    %252 = vmatpush.xpose.msra.mxu0 0.0
    %253 = vmatpush.xpose.msra.mxu0 0.0
    %254 = vmatpush.xpose.msra.mxu0 0.0
    %255 = vmatpush.xpose.msra.mxu0 0.0
    %256 = vmatpush.xpose.msra.mxu0 %v239
    %257 = vmatmul.f32.gmra.mxu0 %v237
    %v258 = vpop.f32.mrf.mxu0
    %v259 = vadd.f32 0.0, %v258
    %260 = vdwg.mxu0
    %v261 = vmul.f32 %v259, 0.35355338
    %v262 = vsel %vm98, %v261, -1e+09
    %v263 = vsel %vm102, %v262, -inf
    %264 = vmax.xlane.f32.xlu0 %v263
    %v265 = vpop.xlane.xlu0 %264
    %v266 = vsub.f32 %v262, %v265
    %v267 = vmul.f32 %v266, 1.442695
    %v268 = vpow.pop %v267
    %v269 = vsel %vm102, %v268, 0.0
    %270 = vadd.xlane.f32.xlu0 %v269
    %v271 = vpop.xlane.xlu0 %270
    %v272 = vrcp.pop %v271
    %v273 = vmul.f32 %v268, %v272
    %274 = vrot.lane.b32.xlu0 %v92, 48
    %v275 = vpop.permute.xlu0 %274
    %v278 = vsel %vm102, %v273, 0
    %280 = vmatpush.msra.mxu0 0.0
    %281 = vmatpush.msra.mxu0 0.0
    %282 = vmatpush.msra.mxu0 0.0
    %283 = vmatpush.msra.mxu0 0.0
    %284 = vmatpush.msra.mxu0 0.0
    %285 = vmatpush.msra.mxu0 0.0
    %286 = vmatpush.msra.mxu0 0.0
    %287 = vmatpush.msra.mxu0 0.0
    %288 = vmatpush.msra.mxu0 0.0
    %289 = vmatpush.msra.mxu0 0.0
    %290 = vmatpush.msra.mxu0 0.0
    %291 = vmatpush.msra.mxu0 0.0
    %292 = vmatpush.msra.mxu0 0.0
    %293 = vmatpush.msra.mxu0 0.0
    %294 = vmatpush.msra.mxu0 0.0
    %295 = vmatpush.msra.mxu0 %v275
    %296 = vmatmul.f32.gmra.mxu0 %v278
    %v297 = vpop.f32.mrf.mxu0
    %v298 = vadd.f32 0.0, %v297
    %299 = vdwg.mxu0
    %300 = vrot.lane.b32.xlu0 %v92, 104
    %v301 = vpop.permute.xlu0 %300
    %302 = vrot.lane.b32.xlu0 %v92, 72
    %v303 = vpop.permute.xlu0 %302
    %v304 = vsel %vm102, %v301, 0
    %v306 = vsel %vm102, %v303, 0
    %308 = vmatpush.xpose.msra.mxu0 0.0
    %309 = vmatpush.xpose.msra.mxu0 0.0
    %310 = vmatpush.xpose.msra.mxu0 0.0
    %311 = vmatpush.xpose.msra.mxu0 0.0
    %312 = vmatpush.xpose.msra.mxu0 0.0
    %313 = vmatpush.xpose.msra.mxu0 0.0
    %314 = vmatpush.xpose.msra.mxu0 0.0
    %315 = vmatpush.xpose.msra.mxu0 0.0
    %316 = vmatpush.xpose.msra.mxu0 0.0
    %317 = vmatpush.xpose.msra.mxu0 0.0
    %318 = vmatpush.xpose.msra.mxu0 0.0
    %319 = vmatpush.xpose.msra.mxu0 0.0
    %320 = vmatpush.xpose.msra.mxu0 0.0
    %321 = vmatpush.xpose.msra.mxu0 0.0
    %322 = vmatpush.xpose.msra.mxu0 0.0
    %323 = vmatpush.xpose.msra.mxu0 %v306
    %324 = vmatmul.f32.gmra.mxu0 %v304
    %v325 = vpop.f32.mrf.mxu0
    %v326 = vadd.f32 0.0, %v325
    %327 = vdwg.mxu0
    %v328 = vmul.f32 %v326, 0.35355338
    %v329 = vsel %vm98, %v328, -1e+09
    %v330 = vsel %vm102, %v329, -inf
    %331 = vmax.xlane.f32.xlu0 %v330
    %v332 = vpop.xlane.xlu0 %331
    %v333 = vsub.f32 %v329, %v332
    %v334 = vmul.f32 %v333, 1.442695
    %v335 = vpow.pop %v334
    %v336 = vsel %vm102, %v335, 0.0
    %337 = vadd.xlane.f32.xlu0 %v336
    %v338 = vpop.xlane.xlu0 %337
    %v339 = vrcp.pop %v338
    %v340 = vmul.f32 %v335, %v339
    %341 = vrot.lane.b32.xlu0 %v92, 40
    %v342 = vpop.permute.xlu0 %341
    %v345 = vsel %vm102, %v340, 0
    %347 = vmatpush.msra.mxu0 0.0
    %348 = vmatpush.msra.mxu0 0.0
    %349 = vmatpush.msra.mxu0 0.0
    %350 = vmatpush.msra.mxu0 0.0
    %351 = vmatpush.msra.mxu0 0.0
    %352 = vmatpush.msra.mxu0 0.0
    %353 = vmatpush.msra.mxu0 0.0
    %354 = vmatpush.msra.mxu0 0.0
    %355 = vmatpush.msra.mxu0 0.0
    %356 = vmatpush.msra.mxu0 0.0
    %357 = vmatpush.msra.mxu0 0.0
    %358 = vmatpush.msra.mxu0 0.0
    %359 = vmatpush.msra.mxu0 0.0
    %360 = vmatpush.msra.mxu0 0.0
    %361 = vmatpush.msra.mxu0 0.0
    %362 = vmatpush.msra.mxu0 %v342
    %363 = vmatmul.f32.gmra.mxu0 %v345
    %v364 = vpop.f32.mrf.mxu0
    %v365 = vadd.f32 0.0, %v364
    %366 = vdwg.mxu0
    %368 = vrot.lane.b32.xlu0 %v231, 8
    %v369 = vpop.permute.xlu0 %368
    %372 = vrot.lane.b32.xlu0 %v298, 16
    %v373 = vpop.permute.xlu0 %372
    %376 = vrot.lane.b32.xlu0 %v365, 24
    %v377 = vpop.permute.xlu0 %376
    %v379 = vsel %vm102, %v164, %v369
    %vm380 = vcmask 130048
    %v381 = vsel %vm380, %v379, %v373
    %vm382 = vcmask 195584
    %v383 = vsel %vm382, %v381, %v377
    %v384 = vld [vmem:[%s6] sm:$0xff]
    %v385 = vld [vmem:[%s6 + $0x8] sm:$0xff]
    %v386 = vld [vmem:[%s6 + $0x10] sm:$0xff]
    %v387 = vld [vmem:[%s6 + $0x18] sm:$0xff]
    %v389 = vsel %vm32, %v383, 0
    %391 = vmatpush.msra.mxu0 0.0
    %392 = vmatpush.msra.mxu0 0.0
    %393 = vmatpush.msra.mxu0 0.0
    %394 = vmatpush.msra.mxu0 0.0
    %395 = vmatpush.msra.mxu0 0.0
    %396 = vmatpush.msra.mxu0 0.0
    %397 = vmatpush.msra.mxu0 0.0
    %398 = vmatpush.msra.mxu0 0.0
    %399 = vmatpush.msra.mxu0 0.0
    %400 = vmatpush.msra.mxu0 0.0
    %401 = vmatpush.msra.mxu0 0.0
    %402 = vmatpush.msra.mxu0 0.0
    %403 = vmatpush.msra.mxu0 %v387
    %404 = vmatpush.msra.mxu0 %v386
    %405 = vmatpush.msra.mxu0 %v385
    %406 = vmatpush.msra.mxu0 %v384
    %407 = vmatmul.f32.gmra.mxu0 %v389
    %v408 = vpop.f32.mrf.mxu0
    %v409 = vadd.f32 0.0, %v408
    %410 = vdwg.mxu0
    %v411 = vadd.f32 %v29, %v409
    %v412 = vperm.slane %v30, 2
    %v413 = vadd.f32 %v411, %v412
    %v414 = vsel %vm32, %v413, 0.0
    %415 = vadd.xlane.f32.xlu0 %v414
    %v416 = vpop.xlane.xlu0 %415
    %v417 = vmul.f32 %v416, %v42
    %v418 = vsub.f32 %v413, %v417
    %v419 = vmul.f32 %v418, %v418
    %v420 = vsel %vm32, %v419, 0.0
    %421 = vadd.xlane.f32.xlu0 %v420
    %v422 = vpop.xlane.xlu0 %421
    %v423 = vmul.f32 %v422, %v42
    %v424 = vadd.f32 %v423, 1e-05
    %v425 = vrsqrt.pop %v424
    %v426 = vmul.f32 %v425, %v424
    %v427 = vmul.f32 %v426, %v425
    %v428 = vmul.f32 0.5, %v427
    %v429 = vsub.f32 1.5, %v428
    %v430 = vmul.f32 %v425, %v429
    %vm431 = vweird.f32 %v424
    %vm432 = vweird.f32 %v425
    %vm433 = vmor %vm431, %vm432
    %v434 = vsel %vm433, %v425, %v430
    %v435 = vmul.f32 %v418, %v434
    %v436 = vperm.slane %v30, 3
    %v437 = vmul.f32 %v435, %v436
    %v438 = vperm.slane %v30, 4
    %v439 = vadd.f32 %v437, %v438
    %v440 = vld [vmem:[%s4] sm:$0xff]
    %v441 = vld [vmem:[%s4 + $0x8] sm:$0xff]
    %v442 = vld [vmem:[%s4 + $0x10] sm:$0xff]
    %v443 = vld [vmem:[%s4 + $0x18] sm:$0xff]
    %v444 = vperm.slane %v31, 0
    %v446 = vsel %vm32, %v439, 0
    %448 = vmatpush.msra.mxu0 0.0
    %449 = vmatpush.msra.mxu0 0.0
    %450 = vmatpush.msra.mxu0 0.0
    %451 = vmatpush.msra.mxu0 0.0
    %452 = vmatpush.msra.mxu0 0.0
    %453 = vmatpush.msra.mxu0 0.0
    %454 = vmatpush.msra.mxu0 0.0
    %455 = vmatpush.msra.mxu0 0.0
    %456 = vmatpush.msra.mxu0 0.0
    %457 = vmatpush.msra.mxu0 0.0
    %458 = vmatpush.msra.mxu0 0.0
    %459 = vmatpush.msra.mxu0 0.0
    %460 = vmatpush.msra.mxu0 %v443
    %461 = vmatpush.msra.mxu0 %v442
    %462 = vmatpush.msra.mxu0 %v441
    %463 = vmatpush.msra.mxu0 %v440
    %464 = vmatmul.f32.gmra.mxu0 %v446
    %v465 = vpop.f32.mrf.mxu0
    %v466 = vadd.f32 %v444, %v465
    %467 = vdwg.mxu0
    %v468 = vmul.f32 %v466, %v466
    %v469 = vmul.f32 %v466, %v468
    %v470 = vmul.f32 %v469, 0.044715
    %v471 = vadd.f32 %v466, %v470
    %v472 = vmul.f32 %v471, 0.7978846
    %v473 = vtanh.pop %v472
    %v474 = vadd.f32 %v473, 1.0
    %v475 = vmul.f32 %v474, 0.5
    %v476 = vmul.f32 %v466, %v475
    %v477 = vld [vmem:[%s5] sm:$0xff]
    %v478 = vld [vmem:[%s5 + $0x8] sm:$0xff]
    %v479 = vld [vmem:[%s5 + $0x10] sm:$0xff]
    %v480 = vld [vmem:[%s5 + $0x18] sm:$0xff]
    %v481 = vld [vmem:[%s5 + $0x20] sm:$0xff]
    %v482 = vld [vmem:[%s5 + $0x28] sm:$0xff]
    %v483 = vld [vmem:[%s5 + $0x30] sm:$0xff]
    %v484 = vld [vmem:[%s5 + $0x38] sm:$0xff]
    %v485 = vld [vmem:[%s5 + $0x40] sm:$0xff]
    %v486 = vld [vmem:[%s5 + $0x48] sm:$0xff]
    %v487 = vld [vmem:[%s5 + $0x50] sm:$0xff]
    %v488 = vld [vmem:[%s5 + $0x58] sm:$0xff]
    %v489 = vld [vmem:[%s5 + $0x60] sm:$0xff]
    %v490 = vld [vmem:[%s5 + $0x68] sm:$0xff]
    %v491 = vld [vmem:[%s5 + $0x70] sm:$0xff]
    %v492 = vld [vmem:[%s5 + $0x78] sm:$0xff]
    %493 = vmatpush.msra.mxu0 %v492
    %494 = vmatpush.msra.mxu0 %v491
    %495 = vmatpush.msra.mxu0 %v490
    %496 = vmatpush.msra.mxu0 %v489
    %497 = vmatpush.msra.mxu0 %v488
    %498 = vmatpush.msra.mxu0 %v487
    %499 = vmatpush.msra.mxu0 %v486
    %500 = vmatpush.msra.mxu0 %v485
    %501 = vmatpush.msra.mxu0 %v484
    %502 = vmatpush.msra.mxu0 %v483
    %503 = vmatpush.msra.mxu0 %v482
    %504 = vmatpush.msra.mxu0 %v481
    %505 = vmatpush.msra.mxu0 %v480
    %506 = vmatpush.msra.mxu0 %v479
    %507 = vmatpush.msra.mxu0 %v478
    %508 = vmatpush.msra.mxu0 %v477
    %509 = vmatmul.f32.gmra.mxu0 %v476
    %v510 = vpop.f32.mrf.mxu0
    %v511 = vadd.f32 0.0, %v510
    %512 = vdwg.mxu0
    %v513 = vadd.f32 %v413, %v511
    %v514 = vperm.slane %v30, 5
    %v515 = vadd.f32 %v513, %v514
    %v516 = vsel %vm32, %v515, 0.0
    %517 = vadd.xlane.f32.xlu0 %v516
    %v518 = vpop.xlane.xlu0 %517
    %v519 = vmul.f32 %v518, %v42
    %v520 = vsub.f32 %v515, %v519
    %v521 = vmul.f32 %v520, %v520
    %v522 = vsel %vm32, %v521, 0.0
    %523 = vadd.xlane.f32.xlu0 %v522
    %v524 = vpop.xlane.xlu0 %523
    %v525 = vmul.f32 %v524, %v42
    %v526 = vadd.f32 %v525, 1e-05
    %v527 = vrsqrt.pop %v526
    %v528 = vmul.f32 %v527, %v526
    %v529 = vmul.f32 %v528, %v527
    %v530 = vmul.f32 0.5, %v529
    %v531 = vsub.f32 1.5, %v530
    %v532 = vmul.f32 %v527, %v531
    %vm533 = vweird.f32 %v526
    %vm534 = vweird.f32 %v527
    %vm535 = vmor %vm533, %vm534
    %v536 = vsel %vm535, %v527, %v532
    %v537 = vmul.f32 %v520, %v536
    %v538 = vperm.slane %v30, 6
    %v539 = vmul.f32 %v537, %v538
    %v540 = vperm.slane %v30, 7
    %v541 = vadd.f32 %v539, %v540
    %542 = vst.msk [vmem:[#allocation4] sm:$0xff] %vm32, %v541
    %s543 = sld [smem:[#allocation3]]
    %v544 = vstv %s543
    %vm545 = vcmp.eq.s32.totalorder %v97, %v544
    %v546 = vsel %vm545, 1, 0
    %v547 = vcvt.s32.f32 %v546
    %v549 = vsel %vm102, %v547, 0
    %551 = vmatpush.msra.mxu0 0.0
    %552 = vmatpush.msra.mxu0 0.0
    %553 = vmatpush.msra.mxu0 0.0
    %554 = vmatpush.msra.mxu0 0.0
    %555 = vmatpush.msra.mxu0 0.0
    %556 = vmatpush.msra.mxu0 0.0
    %557 = vmatpush.msra.mxu0 0.0
    %558 = vmatpush.msra.mxu0 0.0
    %559 = vmatpush.msra.mxu0 0.0
    %560 = vmatpush.msra.mxu0 0.0
    %561 = vmatpush.msra.mxu0 0.0
    %562 = vmatpush.msra.mxu0 0.0
    %563 = vmatpush.msra.mxu0 0.0
    %564 = vmatpush.msra.mxu0 0.0
    %565 = vmatpush.msra.mxu0 0.0
    %566 = vmatpush.msra.mxu0 %v541
    %567 = vmatmul.f32.gmra.mxu0 %v549
    %v568 = vpop.f32.mrf.mxu0
    %v569 = vadd.f32 0.0, %v568
    %570 = vdwg.mxu0
    %575 = vrot.lane.b32.xlu0 %v384, 96
    %v576 = vpop.permute.xlu0 %575
    %577 = vrot.lane.b32.xlu0 %v385, 96
    %v578 = vpop.permute.xlu0 %577
    %579 = vrot.lane.b32.xlu0 %v386, 96
    %v580 = vpop.permute.xlu0 %579
    %581 = vrot.lane.b32.xlu0 %v387, 96
    %v582 = vpop.permute.xlu0 %581
    %v588 = vsel %vm32, %v569, 0
    %590 = vmatpush.msra.mxu0 0.0
    %591 = vmatpush.msra.mxu0 0.0
    %592 = vmatpush.msra.mxu0 0.0
    %593 = vmatpush.msra.mxu0 0.0
    %594 = vmatpush.msra.mxu0 0.0
    %595 = vmatpush.msra.mxu0 0.0
    %596 = vmatpush.msra.mxu0 0.0
    %597 = vmatpush.msra.mxu0 0.0
    %598 = vmatpush.msra.mxu0 0.0
    %599 = vmatpush.msra.mxu0 0.0
    %600 = vmatpush.msra.mxu0 0.0
    %601 = vmatpush.msra.mxu0 0.0
    %602 = vmatpush.msra.mxu0 %v582
    %603 = vmatpush.msra.mxu0 %v580
    %604 = vmatpush.msra.mxu0 %v578
    %605 = vmatpush.msra.mxu0 %v576
    %606 = vmatmul.f32.gmra.mxu0 %v588
    %v607 = vpop.f32.mrf.mxu0
    %v608 = vadd.f32 0.0, %v607
    %609 = vdwg.mxu0
    %vm610 = vcmask 253952
    %611 = vst.msk [vmem:[#allocation6] sm:$0x1] %vm610, %v608
    // Predicated region
    $region26: #{tpu_custom_call.1} parent=1 // pred_check
      _
    $region27: #{tpu_custom_call.1} parent=1 // pred_check_branch
      %613 = sbr.rel (0) target = $region29
    $region28: #{tpu_custom_call.1} parent=1 // pred_region
      %615 = vsyncadd [#allocation5], 0
      %s617 = sshll.u32 [#allocation4], 4
      %s618 = int_to_ptr.vmem [resolvable:$true] %s617
      %s619 = sshll.u32 %s7, 4
      %s620 = int_to_ptr.hbm [resolvable:$true] %s619
      %622 = dma.vmem_to_hbm [thread:$0]  %s618, 128, %s620, [#allocation5]
    $region29: #{tpu_custom_call.1} parent=1 // pred_fallthru
      _
    // Predicated region
    $region30: #{tpu_custom_call.1} parent=1 // pred_check
      _
    $region31: #{tpu_custom_call.1} parent=1 // pred_check_branch
      %624 = sbr.rel (0) target = $region33
    $region32: #{tpu_custom_call.1} parent=1 // pred_region
      %626 = vsyncadd [#allocation7], 0
      %s628 = sshll.u32 [#allocation6], 4
      %s629 = int_to_ptr.vmem [resolvable:$true] %s628
      %s630 = sshll.u32 %s8, 4
      %s631 = int_to_ptr.hbm [resolvable:$true] %s630
      %633 = dma.vmem_to_hbm [thread:$0]  %s629, 16, %s631, [#allocation7]
    $region33: #{tpu_custom_call.1} parent=1 // pred_fallthru
      _
    // Predicated region
    $region34: #{tpu_custom_call.1} parent=1 // pred_check
      _
    $region35: #{tpu_custom_call.1} parent=1 // pred_check_branch
      %635 = sbr.rel (0) target = $region37
    $region36: #{tpu_custom_call.1} parent=1 // pred_region
      %637 = dma.done [#allocation5], 128
    $region37: #{tpu_custom_call.1} parent=1 // pred_fallthru
      _
    // Predicated region
    $region38: #{tpu_custom_call.1} parent=1 // pred_check
      _
    $region39: #{tpu_custom_call.1} parent=1 // pred_check_branch
      %639 = sbr.rel (0) target = $region41
    $region40: #{tpu_custom_call.1} parent=1 // pred_region
      %641 = dma.done [#allocation7], 16
    $region41: #{tpu_custom_call.1} parent=1 // pred_fallthru
      _
    %642 = vsyncpa [#allocation5], 1
    %643 = vsyncpa [#allocation7], 1

</llo_original>
